<compile_context>
chip_gen: v5e
topology: v5e:2x2
jax: 0.10.0
libtpu: 0.0.40
codegen_flags: <defaults>
</compile_context>

<pallas_src>
import functools

import jax
import jax.numpy as jnp
from jax.experimental import pallas as pl
from jax.experimental.pallas import tpu as pltpu


def _round_up(n, m):
    return ((n + m - 1) // m) * m


# ----------------------------------------------------------------------------
# Pallas kernel: encode -> reparameterize -> attn gate -> aux -> decode
# ----------------------------------------------------------------------------
def hicvae_kernel(
    xe_ref,                                    # (TB, input_dim + 2L) = [x | eps]
    w_fc1, w_fc2, w_heads, w_a1, w_a2, w_x1, w_fc5, w_fc6, w_fc7,
    slab_ref,                                  # (1, S) packed biases + w_x2 row
    out_ref,                                   # (TB, recon_pad + tail_pad)
    *, input_dim, latent_dim, matmul_dtype, slab_meta, recon_pad, tail_pad,
):
    f32 = jnp.float32
    L2 = 2 * latent_dim

    def seg(idx):
        off, width = slab_meta[idx]            # static, 128-aligned offsets
        return slab_ref[:, off:off + width].astype(f32)

    def linear(h, w_ref, b_idx):
        lhs = h.astype(matmul_dtype)
        rhs = w_ref[...].astype(matmul_dtype)
        return jnp.dot(lhs, rhs, preferred_element_type=f32) + seg(b_idx)

    xe = xe_ref[...].astype(f32)
    x = xe[:, :input_dim]
    eps = xe[:, input_dim:]                    # [eps1 | eps2]   (TB, 2L)

    # ----- encode -----
    h = jnp.maximum(linear(x, w_fc1, 0), 0.0)            # (TB, 128)
    h = jnp.maximum(linear(h, w_fc2, 1), 0.0)            # (TB, 64)

    # fused latent heads: one MXU push producing (TB, 4L) = [mu1|mu2|lv1|lv2]
    heads = linear(h, w_heads, 2)
    mus = heads[:, :L2]
    lvs = heads[:, L2:]

    # reparameterize (purely elementwise): z = mu + eps * std
    z = mus + eps * jnp.exp(0.5 * lvs)                    # (TB, 2L)

    # attention gate: z * sigmoid(W2 relu(W1 z))
    a = jnp.maximum(linear(z, w_a1, 3), 0.0)              # (TB, 64)
    a = jax.nn.sigmoid(linear(a, w_a2, 4))                # (TB, 2L)
    z = z * a

    # aux head: 32->1 projection as VPU multiply + lane reduce (no N=1 matmul)
    q = jnp.maximum(linear(z, w_x1, 5), 0.0)              # (TB, 32)
    logit = (jnp.sum(q * seg(7), axis=-1, keepdims=True)  # w_x2 row vector
             + seg(6))                                    # b_x2
    sig_aux = jax.nn.sigmoid(logit)                       # (TB, 1)

    # ----- decode -----
    d = jnp.maximum(linear(z, w_fc5, 8), 0.0)             # (TB, 64)
    d = jnp.maximum(linear(d, w_fc6, 9), 0.0)             # (TB, 128)
    recon = jax.nn.sigmoid(linear(d, w_fc7, 10))          # (TB, input_dim)

    # ----- lane-dense stores: 128-aligned offsets, 128-multiple widths -----
    tb = recon.shape[0]
    if input_dim != recon_pad:
        recon = jnp.concatenate(
            [recon, jnp.zeros((tb, recon_pad - input_dim), f32)], axis=1)
    out_ref[:, :recon_pad] = recon.astype(out_ref.dtype)

    tail_parts = [heads, sig_aux]
    pad_w = tail_pad - (4 * latent_dim + 1)
    if pad_w:
        tail_parts.append(jnp.zeros((tb, pad_w), f32))
    tail = jnp.concatenate(tail_parts, axis=1)            # (TB, tail_pad)
    out_ref[:, recon_pad:] = tail.astype(out_ref.dtype)


# ----------------------------------------------------------------------------
# Wrapper
# ----------------------------------------------------------------------------
def hicvae_forward(x, eps1, eps2, params, *, latent_dim, block_b=512,
                   matmul_dtype=jnp.float32, stream_dtype=jnp.float32,
                   vmem_limit_bytes=48 * 1024 * 1024):
    """params: list of (W, b) pairs in PyTorch module order."""
    B, input_dim = x.shape
    L = latent_dim
    f32 = jnp.float32

    ((w1, b1), (w2, b2), (wm1, bm1), (wl1, bl1), (wm2, bm2), (wl2, bl2),
     (wa1, ba1), (wa2, ba2), (wx1, bx1), (wx2, bx2),
     (w5, b5), (w6, b6), (w7, b7)) = params

    # fuse the four latent heads into one matmul, packed [mu1 | mu2 | lv1 | lv2]
    w_heads = jnp.concatenate([wm1, wm2, wl1, wl2], axis=1)   # (64, 4L)
    b_heads = jnp.concatenate([bm1, bm2, bl1, bl2], axis=1)   # (1, 4L)
    w_x2t = wx2.T                                             # (1, 32) row vec

    # pack every (1, N) parameter into one 128-lane-aligned f32 slab
    slab_parts = [b1, b2, b_heads, ba1, ba2, bx1, bx2, w_x2t, b5, b6, b7]
    segs, slab_meta, off = [], [], 0
    for p in slab_parts:
        width = p.shape[1]
        seg_w = _round_up(width, 128)
        segs.append(jnp.pad(p.astype(f32), ((0, 0), (0, seg_w - width))))
        slab_meta.append((off, width))
        off += seg_w
    slab = jnp.concatenate(segs, axis=1)                      # (1, 11*128)
    slab_meta = tuple(slab_meta)

    # matmul weights (optionally bf16 MXU operands; biases stay f32 in slab)
    weights = [w1, w2, w_heads, wa1, wa2, wx1, w5, w6, w7]
    if matmul_dtype != f32:
        weights = [w.astype(matmul_dtype) for w in weights]

    # merged streamed input slab: [x | eps1 | eps2]
    xe = jnp.concatenate([x.astype(f32), eps1.astype(f32), eps2.astype(f32)],
                         axis=1).astype(stream_dtype)         # (B, in_width)
    in_width = input_dim + 2 * L

    # lane-dense output slab layout
    recon_pad = _round_up(input_dim, 128)
    tail_pad = _round_up(4 * L + 1, 128)
    out_width = recon_pad + tail_pad

    # batch tiling: weights stay VMEM-resident, xe / output stream per tile
    min_tile = 16 if matmul_dtype == jnp.bfloat16 else 8
    tb = max(min_tile, min(_round_up(block_b, min_tile), _round_up(B, min_tile)))
    if B >= 2 * min_tile and _round_up(B, tb) // tb < 2:
        tb = _round_up((B + 1) // 2, min_tile)   # >=2 grid steps (v7x megacore)
    padded_B = _round_up(B, tb)
    if padded_B != B:
        xe = jnp.pad(xe, ((0, padded_B - B), (0, 0)))
    n_tiles = padded_B // tb

    def row_spec(width):
        return pl.BlockSpec((tb, width), lambda i: (i, 0))

    def full_spec(a):
        return pl.BlockSpec(a.shape, lambda i: (0, 0))

    fn = pl.pallas_call(
        functools.partial(
            hicvae_kernel,
            input_dim=input_dim, latent_dim=L, matmul_dtype=matmul_dtype,
            slab_meta=slab_meta, recon_pad=recon_pad, tail_pad=tail_pad),
        out_shape=jax.ShapeDtypeStruct((padded_B, out_width), f32),
        grid=(n_tiles,),
        in_specs=[row_spec(in_width)]
                 + [full_spec(w) for w in weights]
                 + [full_spec(slab)],
        out_specs=row_spec(out_width),
        compiler_params=pltpu.CompilerParams(
            dimension_semantics=("parallel",),
            vmem_limit_bytes=vmem_limit_bytes),
    )
    packed = fn(xe, *weights, slab)[:B]

    # cheap XLA slices to split the lane-dense slab
    o = recon_pad
    recon = packed[:, :input_dim]
    mu1 = packed[:, o:o + L]
    mu2 = packed[:, o + L:o + 2 * L]
    lv1 = packed[:, o + 2 * L:o + 3 * L]
    lv2 = packed[:, o + 3 * L:o + 4 * L]
    klw = jnp.mean(packed[:, o + 4 * L])   # global mean finished outside kernel
    return recon, mu1, lv1, mu2, lv2, klw


# ----------------------------------------------------------------------------
# Deterministic parameter initialization (PyTorch-style uniform(-k, k))
# ----------------------------------------------------------------------------
def init_linear(key, in_dim, out_dim):
    kw, kb = jax.random.split(key)
    bound = 1.0 / jnp.sqrt(jnp.float32(in_dim))
    w = jax.random.uniform(kw, (in_dim, out_dim), jnp.float32, -bound, bound)
    b = jax.random.uniform(kb, (1, out_dim), jnp.float32, -bound, bound)
    return w, b


def make_params(key, input_dim, latent_dim):
    layer_dims = [
        (input_dim, 128),            # fc1
        (128, 64),                   # fc2
        (64, latent_dim),            # mu1
        (64, latent_dim),            # lv1
        (64, latent_dim),            # mu2
        (64, latent_dim),            # lv2
        (latent_dim * 2, 64),        # attn[0]
        (64, latent_dim * 2),        # attn[2]
        (latent_dim * 2, 32),        # aux[0]
        (32, 1),                     # aux[2]
        (latent_dim * 2, 64),        # fc5
        (64, 128),                   # fc6
        (128, input_dim),            # fc7
    ]
    keys = jax.random.split(key, len(layer_dims))
    return [init_linear(k, i, o) for k, (i, o) in zip(keys, layer_dims)]


# ----------------------------------------------------------------------------
# Pure-JAX reference for a sanity check
# ----------------------------------------------------------------------------
def hicvae_reference(x, eps1, eps2, params):
    (w1, b1), (w2, b2), (wm1, bm1), (wl1, bl1), (wm2, bm2), (wl2, bl2), \
        (wa1, ba1), (wa2, ba2), (wx1, bx1), (wx2, bx2), \
        (w5, b5), (w6, b6), (w7, b7) = params

    lin = lambda h, w, b: h @ w + b
    h = jax.nn.relu(lin(jax.nn.relu(lin(x, w1, b1)), w2, b2))
    mu1, lv1 = lin(h, wm1, bm1), lin(h, wl1, bl1)
    mu2, lv2 = lin(h, wm2, bm2), lin(h, wl2, bl2)
    z = jnp.concatenate(
        [mu1 + eps1 * jnp.exp(0.5 * lv1), mu2 + eps2 * jnp.exp(0.5 * lv2)], axis=1)
    z = z * jax.nn.sigmoid(lin(jax.nn.relu(lin(z, wa1, ba1)), wa2, ba2))
    klw = jnp.mean(jax.nn.sigmoid(lin(jax.nn.relu(lin(z, wx1, bx1)), wx2, bx2)))
    recon = jax.nn.sigmoid(lin(jax.nn.relu(lin(jax.nn.relu(lin(z, w5, b5)), w6, b6)), w7, b7))
    return recon, mu1, lv1, mu2, lv2, klw


# ----------------------------------------------------------------------------
# Main
# ----------------------------------------------------------------------------
if __name__ == "__main__":
    B, input_dim, latent_dim = 8, 16, 2

    root = jax.random.PRNGKey(0)
    k_x, k_e1, k_e2, k_p = jax.random.split(root, 4)

    x = jax.random.uniform(k_x, (B, input_dim), jnp.float32)       # "data" in [0,1)
    eps1 = jax.random.normal(k_e1, (B, latent_dim), jnp.float32)   # randn_like(mu1)
    eps2 = jax.random.normal(k_e2, (B, latent_dim), jnp.float32)   # randn_like(mu2)
    params = make_params(k_p, input_dim, latent_dim)

    # f32 MXU path — must match the pure-JAX reference tightly
    outs = hicvae_forward(x, eps1, eps2, params, latent_dim=latent_dim)
    outs = jax.block_until_ready(outs)

    refs = hicvae_reference(x, eps1, eps2, params)
    for o, r in zip(outs, refs):
        assert jnp.allclose(o, r, atol=1e-5, rtol=1e-5), "mismatch vs reference"

    # bf16 MXU operands + bf16 input streaming (v6e/v7x feedback): f32 accumulate
    outs_bf16 = hicvae_forward(x, eps1, eps2, params, latent_dim=latent_dim,
                               matmul_dtype=jnp.bfloat16,
                               stream_dtype=jnp.bfloat16)
    outs_bf16 = jax.block_until_ready(outs_bf16)
    assert float(jnp.max(jnp.abs(outs_bf16[0] - outs[0]))) < 0.1, "bf16 path diverged"

    print("KERNEL_OK")
</pallas_src>

<mosaic_0001>
module attributes {stable_mosaic.version = 11 : i64} {
  func.func @hicvae_kernel(%arg0: i32, %arg1: memref<8x20xf32, #tpu.memory_space<vmem>>, %arg2: memref<16x128xf32, #tpu.memory_space<vmem>>, %arg3: memref<128x64xf32, #tpu.memory_space<vmem>>, %arg4: memref<64x8xf32, #tpu.memory_space<vmem>>, %arg5: memref<4x64xf32, #tpu.memory_space<vmem>>, %arg6: memref<64x4xf32, #tpu.memory_space<vmem>>, %arg7: memref<4x32xf32, #tpu.memory_space<vmem>>, %arg8: memref<4x64xf32, #tpu.memory_space<vmem>>, %arg9: memref<64x128xf32, #tpu.memory_space<vmem>>, %arg10: memref<128x16xf32, #tpu.memory_space<vmem>>, %arg11: memref<1x1408xf32, #tpu.memory_space<vmem>>, %arg12: memref<8x256xf32, #tpu.memory_space<vmem>>) attributes {dimension_semantics = [#tpu.dimension_semantics<parallel>], iteration_bounds = array<i64: 1>, scalar_prefetch = 0 : i64, scratch_operands = 0 : i64, tpu.core_type = #tpu.core_type<tc>, window_params = [{transform_indices = @transform_0, window_bounds = array<i64: 8, 20>}, {pipeline_mode = #tpu.pipeline_mode<synchronous>, transform_indices = @transform_1, window_bounds = array<i64: 16, 128>}, {pipeline_mode = #tpu.pipeline_mode<synchronous>, transform_indices = @transform_2, window_bounds = array<i64: 128, 64>}, {pipeline_mode = #tpu.pipeline_mode<synchronous>, transform_indices = @transform_3, window_bounds = array<i64: 64, 8>}, {pipeline_mode = #tpu.pipeline_mode<synchronous>, transform_indices = @transform_4, window_bounds = array<i64: 4, 64>}, {pipeline_mode = #tpu.pipeline_mode<synchronous>, transform_indices = @transform_5, window_bounds = array<i64: 64, 4>}, {pipeline_mode = #tpu.pipeline_mode<synchronous>, transform_indices = @transform_6, window_bounds = array<i64: 4, 32>}, {pipeline_mode = #tpu.pipeline_mode<synchronous>, transform_indices = @transform_7, window_bounds = array<i64: 4, 64>}, {pipeline_mode = #tpu.pipeline_mode<synchronous>, transform_indices = @transform_8, window_bounds = array<i64: 64, 128>}, {pipeline_mode = #tpu.pipeline_mode<synchronous>, transform_indices = @transform_9, window_bounds = array<i64: 128, 16>}, {pipeline_mode = #tpu.pipeline_mode<synchronous>, transform_indices = @transform_10, window_bounds = array<i64: 1, 1408>}, {transform_indices = @transform_11, window_bounds = array<i64: 8, 256>}]} {
    %c0 = arith.constant 0 : index
    %c0_0 = arith.constant 0 : index
    %0 = vector.load %arg1[%c0, %c0_0] : memref<8x20xf32, #tpu.memory_space<vmem>>, vector<8x20xf32>
    %1 = vector.extract_strided_slice %0 {offsets = [0, 0], sizes = [8, 16], strides = [1, 1]} : vector<8x20xf32> to vector<8x16xf32>
    %2 = vector.extract_strided_slice %0 {offsets = [0, 16], sizes = [8, 4], strides = [1, 1]} : vector<8x20xf32> to vector<8x4xf32>
    %c0_1 = arith.constant 0 : index
    %c0_2 = arith.constant 0 : index
    %3 = vector.load %arg2[%c0_1, %c0_2] : memref<16x128xf32, #tpu.memory_space<vmem>>, vector<16x128xf32>
    %cst = arith.constant dense<0.000000e+00> : vector<8x128xf32>
    %4 = tpu.matmul %1, %3, %cst {dimension_numbers = #tpu.dot_dimension_numbers<[1], [0], [0], [1], [0, 0, 1, 1], [], []>} : vector<8x16xf32>, vector<16x128xf32>, vector<8x128xf32> -> vector<8x128xf32>
    %c0_3 = arith.constant 0 : index
    %c0_4 = arith.constant 0 : index
    %5 = vector.load %arg11[%c0_3, %c0_4] : memref<1x1408xf32, #tpu.memory_space<vmem>>, vector<1x128xf32>
    %6 = vector.broadcast %5 : vector<1x128xf32> to vector<8x128xf32>
    %7 = arith.addf %4, %6 : vector<8x128xf32>
    %cst_5 = arith.constant 0.000000e+00 : f32
    %8 = vector.broadcast %cst_5 : f32 to vector<8x128xf32>
    %9 = arith.maximumf %7, %8 : vector<8x128xf32>
    %c0_6 = arith.constant 0 : index
    %c0_7 = arith.constant 0 : index
    %10 = vector.load %arg3[%c0_6, %c0_7] : memref<128x64xf32, #tpu.memory_space<vmem>>, vector<128x64xf32>
    %cst_8 = arith.constant dense<0.000000e+00> : vector<8x64xf32>
    %11 = tpu.matmul %9, %10, %cst_8 {dimension_numbers = #tpu.dot_dimension_numbers<[1], [0], [0], [1], [0, 0, 1, 1], [], []>} : vector<8x128xf32>, vector<128x64xf32>, vector<8x64xf32> -> vector<8x64xf32>
    %c0_9 = arith.constant 0 : index
    %c128 = arith.constant 128 : index
    %12 = vector.load %arg11[%c0_9, %c128] : memref<1x1408xf32, #tpu.memory_space<vmem>>, vector<1x64xf32>
    %13 = vector.broadcast %12 : vector<1x64xf32> to vector<8x64xf32>
    %14 = arith.addf %11, %13 : vector<8x64xf32>
    %cst_10 = arith.constant 0.000000e+00 : f32
    %15 = vector.broadcast %cst_10 : f32 to vector<8x64xf32>
    %16 = arith.maximumf %14, %15 : vector<8x64xf32>
    %c0_11 = arith.constant 0 : index
    %c0_12 = arith.constant 0 : index
    %17 = vector.load %arg4[%c0_11, %c0_12] : memref<64x8xf32, #tpu.memory_space<vmem>>, vector<64x8xf32>
    %cst_13 = arith.constant dense<0.000000e+00> : vector<8x8xf32>
    %18 = tpu.matmul %16, %17, %cst_13 {dimension_numbers = #tpu.dot_dimension_numbers<[1], [0], [0], [1], [0, 0, 1, 1], [], []>} : vector<8x64xf32>, vector<64x8xf32>, vector<8x8xf32> -> vector<8x8xf32>
    %c0_14 = arith.constant 0 : index
    %c256 = arith.constant 256 : index
    %19 = vector.load %arg11[%c0_14, %c256] : memref<1x1408xf32, #tpu.memory_space<vmem>>, vector<1x8xf32>
    %20 = vector.broadcast %19 : vector<1x8xf32> to vector<8x8xf32>
    %21 = arith.addf %18, %20 : vector<8x8xf32>
    %22 = vector.extract_strided_slice %21 {offsets = [0, 0], sizes = [8, 4], strides = [1, 1]} : vector<8x8xf32> to vector<8x4xf32>
    %23 = vector.extract_strided_slice %21 {offsets = [0, 4], sizes = [8, 4], strides = [1, 1]} : vector<8x8xf32> to vector<8x4xf32>
    %cst_15 = arith.constant 5.000000e-01 : f32
    %24 = vector.broadcast %cst_15 : f32 to vector<8x4xf32>
    %25 = arith.mulf %24, %23 : vector<8x4xf32>
    %26 = math.exp %25 : vector<8x4xf32>
    %27 = arith.mulf %2, %26 : vector<8x4xf32>
    %28 = arith.addf %22, %27 : vector<8x4xf32>
    %c0_16 = arith.constant 0 : index
    %c0_17 = arith.constant 0 : index
    %29 = vector.load %arg5[%c0_16, %c0_17] : memref<4x64xf32, #tpu.memory_space<vmem>>, vector<4x64xf32>
    %cst_18 = arith.constant dense<0.000000e+00> : vector<8x64xf32>
    %30 = tpu.matmul %28, %29, %cst_18 {dimension_numbers = #tpu.dot_dimension_numbers<[1], [0], [0], [1], [0, 0, 1, 1], [], []>} : vector<8x4xf32>, vector<4x64xf32>, vector<8x64xf32> -> vector<8x64xf32>
    %c0_19 = arith.constant 0 : index
    %c384 = arith.constant 384 : index
    %31 = vector.load %arg11[%c0_19, %c384] : memref<1x1408xf32, #tpu.memory_space<vmem>>, vector<1x64xf32>
    %32 = vector.broadcast %31 : vector<1x64xf32> to vector<8x64xf32>
    %33 = arith.addf %30, %32 : vector<8x64xf32>
    %cst_20 = arith.constant 0.000000e+00 : f32
    %34 = vector.broadcast %cst_20 : f32 to vector<8x64xf32>
    %35 = arith.maximumf %33, %34 : vector<8x64xf32>
    %c0_21 = arith.constant 0 : index
    %c0_22 = arith.constant 0 : index
    %36 = vector.load %arg6[%c0_21, %c0_22] : memref<64x4xf32, #tpu.memory_space<vmem>>, vector<64x4xf32>
    %cst_23 = arith.constant dense<0.000000e+00> : vector<8x4xf32>
    %37 = tpu.matmul %35, %36, %cst_23 {dimension_numbers = #tpu.dot_dimension_numbers<[1], [0], [0], [1], [0, 0, 1, 1], [], []>} : vector<8x64xf32>, vector<64x4xf32>, vector<8x4xf32> -> vector<8x4xf32>
    %c0_24 = arith.constant 0 : index
    %c512 = arith.constant 512 : index
    %38 = vector.load %arg11[%c0_24, %c512] : memref<1x1408xf32, #tpu.memory_space<vmem>>, vector<1x4xf32>
    %39 = vector.broadcast %38 : vector<1x4xf32> to vector<8x4xf32>
    %40 = arith.addf %37, %39 : vector<8x4xf32>
    %41 = arith.negf %40 : vector<8x4xf32>
    %42 = math.exp %41 : vector<8x4xf32>
    %cst_25 = arith.constant 1.000000e+00 : f32
    %43 = vector.broadcast %cst_25 : f32 to vector<8x4xf32>
    %44 = arith.addf %43, %42 : vector<8x4xf32>
    %45 = arith.divf %43, %44 : vector<8x4xf32>
    %46 = arith.mulf %28, %45 : vector<8x4xf32>
    %c0_26 = arith.constant 0 : index
    %c0_27 = arith.constant 0 : index
    %47 = vector.load %arg7[%c0_26, %c0_27] : memref<4x32xf32, #tpu.memory_space<vmem>>, vector<4x32xf32>
    %cst_28 = arith.constant dense<0.000000e+00> : vector<8x32xf32>
    %48 = tpu.matmul %46, %47, %cst_28 {dimension_numbers = #tpu.dot_dimension_numbers<[1], [0], [0], [1], [0, 0, 1, 1], [], []>} : vector<8x4xf32>, vector<4x32xf32>, vector<8x32xf32> -> vector<8x32xf32>
    %c0_29 = arith.constant 0 : index
    %c640 = arith.constant 640 : index
    %49 = vector.load %arg11[%c0_29, %c640] : memref<1x1408xf32, #tpu.memory_space<vmem>>, vector<1x32xf32>
    %50 = vector.broadcast %49 : vector<1x32xf32> to vector<8x32xf32>
    %51 = arith.addf %48, %50 : vector<8x32xf32>
    %cst_30 = arith.constant 0.000000e+00 : f32
    %52 = vector.broadcast %cst_30 : f32 to vector<8x32xf32>
    %53 = arith.maximumf %51, %52 : vector<8x32xf32>
    %c0_31 = arith.constant 0 : index
    %c896 = arith.constant 896 : index
    %54 = vector.load %arg11[%c0_31, %c896] : memref<1x1408xf32, #tpu.memory_space<vmem>>, vector<1x32xf32>
    %55 = vector.broadcast %54 : vector<1x32xf32> to vector<8x32xf32>
    %56 = arith.mulf %53, %55 : vector<8x32xf32>
    %cst_32 = arith.constant dense<0.000000e+00> : vector<8xf32>
    %57 = vector.multi_reduction <add>, %56, %cst_32 [1] : vector<8x32xf32> to vector<8xf32>
    %58 = vector.shape_cast %57 : vector<8xf32> to vector<8x1xf32>
    %c0_33 = arith.constant 0 : index
    %c768 = arith.constant 768 : index
    %59 = vector.load %arg11[%c0_33, %c768] : memref<1x1408xf32, #tpu.memory_space<vmem>>, vector<1x1xf32>
    %60 = vector.broadcast %59 : vector<1x1xf32> to vector<8x1xf32>
    %61 = arith.addf %58, %60 : vector<8x1xf32>
    %62 = arith.negf %61 : vector<8x1xf32>
    %63 = math.exp %62 : vector<8x1xf32>
    %cst_34 = arith.constant 1.000000e+00 : f32
    %64 = vector.broadcast %cst_34 : f32 to vector<8x1xf32>
    %65 = arith.addf %64, %63 : vector<8x1xf32>
    %66 = arith.divf %64, %65 : vector<8x1xf32>
    %c0_35 = arith.constant 0 : index
    %c0_36 = arith.constant 0 : index
    %67 = vector.load %arg8[%c0_35, %c0_36] : memref<4x64xf32, #tpu.memory_space<vmem>>, vector<4x64xf32>
    %cst_37 = arith.constant dense<0.000000e+00> : vector<8x64xf32>
    %68 = tpu.matmul %46, %67, %cst_37 {dimension_numbers = #tpu.dot_dimension_numbers<[1], [0], [0], [1], [0, 0, 1, 1], [], []>} : vector<8x4xf32>, vector<4x64xf32>, vector<8x64xf32> -> vector<8x64xf32>
    %c0_38 = arith.constant 0 : index
    %c1024 = arith.constant 1024 : index
    %69 = vector.load %arg11[%c0_38, %c1024] : memref<1x1408xf32, #tpu.memory_space<vmem>>, vector<1x64xf32>
    %70 = vector.broadcast %69 : vector<1x64xf32> to vector<8x64xf32>
    %71 = arith.addf %68, %70 : vector<8x64xf32>
    %cst_39 = arith.constant 0.000000e+00 : f32
    %72 = vector.broadcast %cst_39 : f32 to vector<8x64xf32>
    %73 = arith.maximumf %71, %72 : vector<8x64xf32>
    %c0_40 = arith.constant 0 : index
    %c0_41 = arith.constant 0 : index
    %74 = vector.load %arg9[%c0_40, %c0_41] : memref<64x128xf32, #tpu.memory_space<vmem>>, vector<64x128xf32>
    %cst_42 = arith.constant dense<0.000000e+00> : vector<8x128xf32>
    %75 = tpu.matmul %73, %74, %cst_42 {dimension_numbers = #tpu.dot_dimension_numbers<[1], [0], [0], [1], [0, 0, 1, 1], [], []>} : vector<8x64xf32>, vector<64x128xf32>, vector<8x128xf32> -> vector<8x128xf32>
    %c0_43 = arith.constant 0 : index
    %c1152 = arith.constant 1152 : index
    %76 = vector.load %arg11[%c0_43, %c1152] : memref<1x1408xf32, #tpu.memory_space<vmem>>, vector<1x128xf32>
    %77 = vector.broadcast %76 : vector<1x128xf32> to vector<8x128xf32>
    %78 = arith.addf %75, %77 : vector<8x128xf32>
    %cst_44 = arith.constant 0.000000e+00 : f32
    %79 = vector.broadcast %cst_44 : f32 to vector<8x128xf32>
    %80 = arith.maximumf %78, %79 : vector<8x128xf32>
    %c0_45 = arith.constant 0 : index
    %c0_46 = arith.constant 0 : index
    %81 = vector.load %arg10[%c0_45, %c0_46] : memref<128x16xf32, #tpu.memory_space<vmem>>, vector<128x16xf32>
    %cst_47 = arith.constant dense<0.000000e+00> : vector<8x16xf32>
    %82 = tpu.matmul %80, %81, %cst_47 {dimension_numbers = #tpu.dot_dimension_numbers<[1], [0], [0], [1], [0, 0, 1, 1], [], []>} : vector<8x128xf32>, vector<128x16xf32>, vector<8x16xf32> -> vector<8x16xf32>
    %c0_48 = arith.constant 0 : index
    %c1280 = arith.constant 1280 : index
    %83 = vector.load %arg11[%c0_48, %c1280] : memref<1x1408xf32, #tpu.memory_space<vmem>>, vector<1x16xf32>
    %84 = vector.broadcast %83 : vector<1x16xf32> to vector<8x16xf32>
    %85 = arith.addf %82, %84 : vector<8x16xf32>
    %86 = arith.negf %85 : vector<8x16xf32>
    %87 = math.exp %86 : vector<8x16xf32>
    %cst_49 = arith.constant 1.000000e+00 : f32
    %88 = vector.broadcast %cst_49 : f32 to vector<8x16xf32>
    %89 = arith.addf %88, %87 : vector<8x16xf32>
    %90 = arith.divf %88, %89 : vector<8x16xf32>
    %cst_50 = arith.constant 0.000000e+00 : f32
    %91 = vector.broadcast %cst_50 : f32 to vector<8x112xf32>
    %92 = tpu.concatenate %90, %91 in 1 : vector<8x16xf32>, vector<8x112xf32> -> vector<8x128xf32>
    %c0_51 = arith.constant 0 : index
    %c0_52 = arith.constant 0 : index
    %93 = vector.load %arg12[%c0_51, %c0_52] : memref<8x256xf32, #tpu.memory_space<vmem>>, vector<8x128xf32>
    tpu.vector_store %arg12[%c0_51, %c0_52], %92 {strides = array<i32>} : memref<8x256xf32, #tpu.memory_space<vmem>>, vector<8x128xf32>,
    %cst_53 = arith.constant 0.000000e+00 : f32
    %94 = vector.broadcast %cst_53 : f32 to vector<8x119xf32>
    %95 = tpu.concatenate %21, %66, %94 in 1 : vector<8x8xf32>, vector<8x1xf32>, vector<8x119xf32> -> vector<8x128xf32>
    %c0_54 = arith.constant 0 : index
    %c128_55 = arith.constant 128 : index
    %96 = vector.load %arg12[%c0_54, %c128_55] : memref<8x256xf32, #tpu.memory_space<vmem>>, vector<8x128xf32>
    tpu.vector_store %arg12[%c0_54, %c128_55], %95 {strides = array<i32>} : memref<8x256xf32, #tpu.memory_space<vmem>>, vector<8x128xf32>,
    return
  }
  func.func @transform_0(%arg0: i32) -> (i32, i32) {
    %c0_i32 = arith.constant 0 : i32
    %c0_i32_0 = arith.constant 0 : i32
    return %arg0, %c0_i32 : i32, i32
  }
  func.func @transform_1(%arg0: i32) -> (i32, i32) {
    %c0_i32 = arith.constant 0 : i32
    %c0_i32_0 = arith.constant 0 : i32
    %c0_i32_1 = arith.constant 0 : i32
    return %c0_i32, %c0_i32_0 : i32, i32
  }
  func.func @transform_2(%arg0: i32) -> (i32, i32) {
    %c0_i32 = arith.constant 0 : i32
    %c0_i32_0 = arith.constant 0 : i32
    %c0_i32_1 = arith.constant 0 : i32
    return %c0_i32, %c0_i32_0 : i32, i32
  }
  func.func @transform_3(%arg0: i32) -> (i32, i32) {
    %c0_i32 = arith.constant 0 : i32
    %c0_i32_0 = arith.constant 0 : i32
    %c0_i32_1 = arith.constant 0 : i32
    return %c0_i32, %c0_i32_0 : i32, i32
  }
  func.func @transform_4(%arg0: i32) -> (i32, i32) {
    %c0_i32 = arith.constant 0 : i32
    %c0_i32_0 = arith.constant 0 : i32
    %c0_i32_1 = arith.constant 0 : i32
    return %c0_i32, %c0_i32_0 : i32, i32
  }
  func.func @transform_5(%arg0: i32) -> (i32, i32) {
    %c0_i32 = arith.constant 0 : i32
    %c0_i32_0 = arith.constant 0 : i32
    %c0_i32_1 = arith.constant 0 : i32
    return %c0_i32, %c0_i32_0 : i32, i32
  }
  func.func @transform_6(%arg0: i32) -> (i32, i32) {
    %c0_i32 = arith.constant 0 : i32
    %c0_i32_0 = arith.constant 0 : i32
    %c0_i32_1 = arith.constant 0 : i32
    return %c0_i32, %c0_i32_0 : i32, i32
  }
  func.func @transform_7(%arg0: i32) -> (i32, i32) {
    %c0_i32 = arith.constant 0 : i32
    %c0_i32_0 = arith.constant 0 : i32
    %c0_i32_1 = arith.constant 0 : i32
    return %c0_i32, %c0_i32_0 : i32, i32
  }
  func.func @transform_8(%arg0: i32) -> (i32, i32) {
    %c0_i32 = arith.constant 0 : i32
    %c0_i32_0 = arith.constant 0 : i32
    %c0_i32_1 = arith.constant 0 : i32
    return %c0_i32, %c0_i32_0 : i32, i32
  }
  func.func @transform_9(%arg0: i32) -> (i32, i32) {
    %c0_i32 = arith.constant 0 : i32
    %c0_i32_0 = arith.constant 0 : i32
    %c0_i32_1 = arith.constant 0 : i32
    return %c0_i32, %c0_i32_0 : i32, i32
  }
  func.func @transform_10(%arg0: i32) -> (i32, i32) {
    %c0_i32 = arith.constant 0 : i32
    %c0_i32_0 = arith.constant 0 : i32
    %c0_i32_1 = arith.constant 0 : i32
    return %c0_i32, %c0_i32_0 : i32, i32
  }
  func.func @transform_11(%arg0: i32) -> (i32, i32) {
    %c0_i32 = arith.constant 0 : i32
    %c0_i32_0 = arith.constant 0 : i32
    return %arg0, %c0_i32 : i32, i32
  }
}

</mosaic_0001>

<llo_original>
// kernel: tpu_custom_call.1
$region0: #{tpu_custom_call.1}
  #allocation0 [shape = 'u32[]', space=smem, size = 0x4, offset = 0x4, fixed_abs, tag = 'smem constant byte address 0x4 - core index']
  #allocation1 [shape = 'u32[72,128]{1,0:T(1,128)}', space=vmem, size = 0x9000, scoped, tag = 'internal scratch']
  %s0 = inlined_call_operand.vmem [shape: f32[8,20], index: 0, kind: input, shape index: {}]
  %s1 = inlined_call_operand.vmem [shape: f32[16,128], index: 1, kind: input, shape index: {}]
  %s2 = inlined_call_operand.vmem [shape: f32[128,64], index: 2, kind: input, shape index: {}]
  %s3 = inlined_call_operand.vmem [shape: f32[64,8], index: 3, kind: input, shape index: {}]
  %s4 = inlined_call_operand.vmem [shape: f32[4,64], index: 4, kind: input, shape index: {}]
  %s5 = inlined_call_operand.vmem [shape: f32[64,4], index: 5, kind: input, shape index: {}]
  %s6 = inlined_call_operand.vmem [shape: f32[4,32], index: 6, kind: input, shape index: {}]
  %s7 = inlined_call_operand.vmem [shape: f32[4,64], index: 7, kind: input, shape index: {}]
  %s8 = inlined_call_operand.vmem [shape: f32[64,128], index: 8, kind: input, shape index: {}]
  %s9 = inlined_call_operand.vmem [shape: f32[128,16], index: 9, kind: input, shape index: {}]
  %s10 = inlined_call_operand.vmem [shape: f32[1,1408], index: 10, kind: input, shape index: {}]
  %s11 = inlined_call_operand.hbm [shape: f32[8,256], index: 11, kind: output, shape index: {}]
  %s12 = sld [smem:[#allocation0]]
  $region54: #{tpu_custom_call.1} parent=0
    _
  %s14 = ssub.s32 1, %s12
  %s15 = scalar_select 0, %s14, %s12
  $region1: #{tpu_custom_call.1} parent=0
    #allocation2 [shape = 'u8[8192]{0}', space=vmem, size = 0x2000, scoped, tag = 'output window, operand 0, single buffered']
    #allocation3 [shape = 's32[1]{0}', space=sflag, size = 0x4, scoped, tag = 'scoped memory for tpu_custom_call.1']
    %16 = vsyncpa [#allocation3], 0
    // Predicated region
    $region2: #{tpu_custom_call.1} parent=1 // pred_check
      _
    $region3: #{tpu_custom_call.1} parent=1 // pred_check_branch
      %18 = sbr.rel (0) target = $region5
    $region4: #{tpu_custom_call.1} parent=1 // pred_region
      _
    $region5: #{tpu_custom_call.1} parent=1 // pred_fallthru
      _
    // Predicated region
    $region6: #{tpu_custom_call.1} parent=1 // pred_check
      _
    $region7: #{tpu_custom_call.1} parent=1 // pred_check_branch
      %20 = sbr.rel (0) target = $region9
    $region8: #{tpu_custom_call.1} parent=1 // pred_region
      _
    $region9: #{tpu_custom_call.1} parent=1 // pred_fallthru
      _
    // Predicated region
    $region10: #{tpu_custom_call.1} parent=1 // pred_check
      _
    $region11: #{tpu_custom_call.1} parent=1 // pred_check_branch
      %22 = sbr.rel (0) target = $region13
    $region12: #{tpu_custom_call.1} parent=1 // pred_region
      _
    $region13: #{tpu_custom_call.1} parent=1 // pred_fallthru
      _
    // Predicated region
    $region14: #{tpu_custom_call.1} parent=1 // pred_check
      _
    $region15: #{tpu_custom_call.1} parent=1 // pred_check_branch
      %24 = sbr.rel (0) target = $region17
    $region16: #{tpu_custom_call.1} parent=1 // pred_region
      _
    $region17: #{tpu_custom_call.1} parent=1 // pred_fallthru
      _
    // Predicated region
    $region18: #{tpu_custom_call.1} parent=1 // pred_check
      _
    $region19: #{tpu_custom_call.1} parent=1 // pred_check_branch
      %26 = sbr.rel (0) target = $region21
    $region20: #{tpu_custom_call.1} parent=1 // pred_region
      _
    $region21: #{tpu_custom_call.1} parent=1 // pred_fallthru
      _
    // Predicated region
    $region22: #{tpu_custom_call.1} parent=1 // pred_check
      _
    $region23: #{tpu_custom_call.1} parent=1 // pred_check_branch
      %28 = sbr.rel (0) target = $region25
    $region24: #{tpu_custom_call.1} parent=1 // pred_region
      _
    $region25: #{tpu_custom_call.1} parent=1 // pred_fallthru
      _
    // Predicated region
    $region26: #{tpu_custom_call.1} parent=1 // pred_check
      _
    $region27: #{tpu_custom_call.1} parent=1 // pred_check_branch
      %30 = sbr.rel (0) target = $region29
    $region28: #{tpu_custom_call.1} parent=1 // pred_region
      _
    $region29: #{tpu_custom_call.1} parent=1 // pred_fallthru
      _
    // Predicated region
    $region30: #{tpu_custom_call.1} parent=1 // pred_check
      _
    $region31: #{tpu_custom_call.1} parent=1 // pred_check_branch
      %32 = sbr.rel (0) target = $region33
    $region32: #{tpu_custom_call.1} parent=1 // pred_region
      _
    $region33: #{tpu_custom_call.1} parent=1 // pred_fallthru
      _
    // Predicated region
    $region34: #{tpu_custom_call.1} parent=1 // pred_check
      _
    $region35: #{tpu_custom_call.1} parent=1 // pred_check_branch
      %34 = sbr.rel (0) target = $region37
    $region36: #{tpu_custom_call.1} parent=1 // pred_region
      _
    $region37: #{tpu_custom_call.1} parent=1 // pred_fallthru
      _
    // Predicated region
    $region38: #{tpu_custom_call.1} parent=1 // pred_check
      _
    $region39: #{tpu_custom_call.1} parent=1 // pred_check_branch
      %36 = sbr.rel (0) target = $region41
    $region40: #{tpu_custom_call.1} parent=1 // pred_region
      _
    $region41: #{tpu_custom_call.1} parent=1 // pred_fallthru
      _
    // Predicated region
    $region42: #{tpu_custom_call.1} parent=1 // pred_check
      _
    $region43: #{tpu_custom_call.1} parent=1 // pred_check_branch
      %38 = sbr.rel (0) target = $region45
    $region44: #{tpu_custom_call.1} parent=1 // pred_region
      _
    $region45: #{tpu_custom_call.1} parent=1 // pred_fallthru
      _
    %v39 = vld [vmem:[%s0] sm:$0xff]
    %v40 = vld [vmem:[%s1] sm:$0xff]
    %v41 = vld [vmem:[%s1 + $0x8] sm:$0xff]
    %v42 = vld [vmem:[%s10] sm:$0x1]
    %v44 = vperm.slane %v42, 0
    %vm46 = vcmask 130048
    %v48 = vsel %vm46, %v39, 0
    %50 = vmatpush.msra.mxu0 0.0
    %51 = vmatpush.msra.mxu0 0.0
    %52 = vmatpush.msra.mxu0 0.0
    %53 = vmatpush.msra.mxu0 0.0
    %54 = vmatpush.msra.mxu0 0.0
    %55 = vmatpush.msra.mxu0 0.0
    %56 = vmatpush.msra.mxu0 0.0
    %57 = vmatpush.msra.mxu0 0.0
    %58 = vmatpush.msra.mxu0 0.0
    %59 = vmatpush.msra.mxu0 0.0
    %60 = vmatpush.msra.mxu0 0.0
    %61 = vmatpush.msra.mxu0 0.0
    %62 = vmatpush.msra.mxu0 0.0
    %63 = vmatpush.msra.mxu0 0.0
    %64 = vmatpush.msra.mxu0 %v41
    %65 = vmatpush.msra.mxu0 %v40
    %66 = vmatmul.f32.gmra.mxu0 %v48
    %v67 = vpop.f32.mrf.mxu0
    %v68 = vadd.f32 %v44, %v67
    %69 = vdwg.mxu0
    %v70 = vmax.f32 %v68, 0.0
    %v71 = vld [vmem:[%s2] sm:$0xff]
    %v72 = vld [vmem:[%s2 + $0x8] sm:$0xff]
    %v73 = vld [vmem:[%s2 + $0x10] sm:$0xff]
    %v74 = vld [vmem:[%s2 + $0x18] sm:$0xff]
    %v75 = vld [vmem:[%s2 + $0x20] sm:$0xff]
    %v76 = vld [vmem:[%s2 + $0x28] sm:$0xff]
    %v77 = vld [vmem:[%s2 + $0x30] sm:$0xff]
    %v78 = vld [vmem:[%s2 + $0x38] sm:$0xff]
    %v79 = vld [vmem:[%s2 + $0x40] sm:$0xff]
    %v80 = vld [vmem:[%s2 + $0x48] sm:$0xff]
    %v81 = vld [vmem:[%s2 + $0x50] sm:$0xff]
    %v82 = vld [vmem:[%s2 + $0x58] sm:$0xff]
    %v83 = vld [vmem:[%s2 + $0x60] sm:$0xff]
    %v84 = vld [vmem:[%s2 + $0x68] sm:$0xff]
    %v85 = vld [vmem:[%s2 + $0x70] sm:$0xff]
    %v86 = vld [vmem:[%s2 + $0x78] sm:$0xff]
    %v87 = vld [vmem:[%s10 + $0x1] sm:$0x1]
    %v89 = vperm.slane %v87, 0
    %91 = vmatpush.msra.mxu0 %v86
    %92 = vmatpush.msra.mxu0 %v85
    %93 = vmatpush.msra.mxu0 %v84
    %94 = vmatpush.msra.mxu0 %v83
    %95 = vmatpush.msra.mxu0 %v82
    %96 = vmatpush.msra.mxu0 %v81
    %97 = vmatpush.msra.mxu0 %v80
    %98 = vmatpush.msra.mxu0 %v79
    %99 = vmatpush.msra.mxu0 %v78
    %100 = vmatpush.msra.mxu0 %v77
    %101 = vmatpush.msra.mxu0 %v76
    %102 = vmatpush.msra.mxu0 %v75
    %103 = vmatpush.msra.mxu0 %v74
    %104 = vmatpush.msra.mxu0 %v73
    %105 = vmatpush.msra.mxu0 %v72
    %106 = vmatpush.msra.mxu0 %v71
    %107 = vmatmul.f32.gmra.mxu0 %v70
    %v108 = vpop.f32.mrf.mxu0
    %v109 = vadd.f32 %v89, %v108
    %110 = vdwg.mxu0
    %v111 = vmax.f32 %v109, 0.0
    %v112 = vld [vmem:[%s3] sm:$0xff]
    %v113 = vld [vmem:[%s3 + $0x8] sm:$0xff]
    %v114 = vld [vmem:[%s3 + $0x10] sm:$0xff]
    %v115 = vld [vmem:[%s3 + $0x18] sm:$0xff]
    %v116 = vld [vmem:[%s3 + $0x20] sm:$0xff]
    %v117 = vld [vmem:[%s3 + $0x28] sm:$0xff]
    %v118 = vld [vmem:[%s3 + $0x30] sm:$0xff]
    %v119 = vld [vmem:[%s3 + $0x38] sm:$0xff]
    %v120 = vld [vmem:[%s10 + $0x2] sm:$0x1]
    %v122 = vperm.slane %v120, 0
    %vm124 = vcmask 523264
    %v126 = vsel %vm124, %v111, 0
    %128 = vmatpush.msra.mxu0 0.0
    %129 = vmatpush.msra.mxu0 0.0
    %130 = vmatpush.msra.mxu0 0.0
    %131 = vmatpush.msra.mxu0 0.0
    %132 = vmatpush.msra.mxu0 0.0
    %133 = vmatpush.msra.mxu0 0.0
    %134 = vmatpush.msra.mxu0 0.0
    %135 = vmatpush.msra.mxu0 0.0
    %136 = vmatpush.msra.mxu0 %v119
    %137 = vmatpush.msra.mxu0 %v118
    %138 = vmatpush.msra.mxu0 %v117
    %139 = vmatpush.msra.mxu0 %v116
    %140 = vmatpush.msra.mxu0 %v115
    %141 = vmatpush.msra.mxu0 %v114
    %142 = vmatpush.msra.mxu0 %v113
    %143 = vmatpush.msra.mxu0 %v112
    %144 = vmatmul.f32.gmra.mxu0 %v126
    %v145 = vpop.f32.mrf.mxu0
    %v146 = vadd.f32 %v122, %v145
    %147 = vdwg.mxu0
    %v148 = vmul.f32 %v146, 0.5
    %v149 = vmul.f32 %v148, 1.442695
    %v150 = vpow.pop %v149
    %152 = vrot.lane.b32.xlu0 %v150, 12
    %v153 = vpop.permute.xlu0 %152
    %v155 = vmul.f32 %v39, %v153
    %157 = vrot.lane.b32.xlu0 %v155, 112
    %v158 = vpop.permute.xlu0 %157
    %v160 = vadd.f32 %v146, %v158
    %v161 = vld [vmem:[%s4] sm:$0xf]
    %v162 = vld [vmem:[%s10 + $0x3] sm:$0x1]
    %v164 = vperm.slane %v162, 0
    %vm166 = vcmask 31744
    %v168 = vsel %vm166, %v160, 0
    %vm170 = vcmask 1043456
    %v172 = vsel %vm170, %v161, 0
    %174 = vmatpush.msra.mxu0 0.0
    %175 = vmatpush.msra.mxu0 0.0
    %176 = vmatpush.msra.mxu0 0.0
    %177 = vmatpush.msra.mxu0 0.0
    %178 = vmatpush.msra.mxu0 0.0
    %179 = vmatpush.msra.mxu0 0.0
    %180 = vmatpush.msra.mxu0 0.0
    %181 = vmatpush.msra.mxu0 0.0
    %182 = vmatpush.msra.mxu0 0.0
    %183 = vmatpush.msra.mxu0 0.0
    %184 = vmatpush.msra.mxu0 0.0
    %185 = vmatpush.msra.mxu0 0.0
    %186 = vmatpush.msra.mxu0 0.0
    %187 = vmatpush.msra.mxu0 0.0
    %188 = vmatpush.msra.mxu0 0.0
    %189 = vmatpush.msra.mxu0 %v172
    %190 = vmatmul.f32.gmra.mxu0 %v168
    %v191 = vpop.f32.mrf.mxu0
    %v192 = vadd.f32 %v164, %v191
    %193 = vdwg.mxu0
    %v194 = vmax.f32 %v192, 0.0
    %v195 = vld [vmem:[%s5] sm:$0xff]
    %v196 = vld [vmem:[%s5 + $0x8] sm:$0xff]
    %v197 = vld [vmem:[%s5 + $0x10] sm:$0xff]
    %v198 = vld [vmem:[%s5 + $0x18] sm:$0xff]
    %v199 = vld [vmem:[%s5 + $0x20] sm:$0xff]
    %v200 = vld [vmem:[%s5 + $0x28] sm:$0xff]
    %v201 = vld [vmem:[%s5 + $0x30] sm:$0xff]
    %v202 = vld [vmem:[%s5 + $0x38] sm:$0xff]
    %v203 = vld [vmem:[%s10 + $0x4] sm:$0x1]
    %v205 = vperm.slane %v203, 0
    %v208 = vsel %vm124, %v194, 0
    %210 = vmatpush.msra.mxu0 0.0
    %211 = vmatpush.msra.mxu0 0.0
    %212 = vmatpush.msra.mxu0 0.0
    %213 = vmatpush.msra.mxu0 0.0
    %214 = vmatpush.msra.mxu0 0.0
    %215 = vmatpush.msra.mxu0 0.0
    %216 = vmatpush.msra.mxu0 0.0
    %217 = vmatpush.msra.mxu0 0.0
    %218 = vmatpush.msra.mxu0 %v202
    %219 = vmatpush.msra.mxu0 %v201
    %220 = vmatpush.msra.mxu0 %v200
    %221 = vmatpush.msra.mxu0 %v199
    %222 = vmatpush.msra.mxu0 %v198
    %223 = vmatpush.msra.mxu0 %v197
    %224 = vmatpush.msra.mxu0 %v196
    %225 = vmatpush.msra.mxu0 %v195
    %226 = vmatmul.f32.gmra.mxu0 %v208
    %v227 = vpop.f32.mrf.mxu0
    %v228 = vadd.f32 %v205, %v227
    %229 = vdwg.mxu0
    %v230 = vxor.u32 %v228, 2147483648
    %v231 = vmul.f32 %v230, 1.442695
    %v232 = vpow.pop %v231
    %v233 = vadd.f32 %v232, 1.0
    %v234 = vrcp.pop %v233
    %v235 = vmul.f32 %v233, %v234
    %v236 = vsub.f32 1.0, %v235
    %v237 = vmul.f32 %v234, %v236
    %v238 = vadd.f32 %v234, %v237
    %vm239 = vweird.f32 %v233
    %vm240 = vweird.f32 %v234
    %vm241 = vmor %vm239, %vm240
    %v242 = vsel %vm241, %v234, %v238
    %v243 = vand.u32 2147483647, %v233
    %vm244 = vcmp.eq.f32.partialorder %v243, 8.507059e+37
    %v245 = vand.u32 %v233, 2147483648
    %v246 = vor.u32 1.1754944e-38, %v245
    %v247 = vsel %vm244, %v246, %v242
    %v248 = vmul.f32 1.0, %v247
    %v249 = vmul.f32 %v160, %v248
    %v250 = vld [vmem:[%s6] sm:$0xf]
    %v251 = vld [vmem:[%s10 + $0x5] sm:$0x1]
    %v253 = vperm.slane %v251, 0
    %v256 = vsel %vm166, %v249, 0
    %v259 = vsel %vm170, %v250, 0
    %261 = vmatpush.msra.mxu0 0.0
    %262 = vmatpush.msra.mxu0 0.0
    %263 = vmatpush.msra.mxu0 0.0
    %264 = vmatpush.msra.mxu0 0.0
    %265 = vmatpush.msra.mxu0 0.0
    %266 = vmatpush.msra.mxu0 0.0
    %267 = vmatpush.msra.mxu0 0.0
    %268 = vmatpush.msra.mxu0 0.0
    %269 = vmatpush.msra.mxu0 0.0
    %270 = vmatpush.msra.mxu0 0.0
    %271 = vmatpush.msra.mxu0 0.0
    %272 = vmatpush.msra.mxu0 0.0
    %273 = vmatpush.msra.mxu0 0.0
    %274 = vmatpush.msra.mxu0 0.0
    %275 = vmatpush.msra.mxu0 0.0
    %276 = vmatpush.msra.mxu0 %v259
    %277 = vmatmul.f32.gmra.mxu0 %v256
    %v278 = vpop.f32.mrf.mxu0
    %v279 = vadd.f32 %v253, %v278
    %280 = vdwg.mxu0
    %v281 = vmax.f32 %v279, 0.0
    %v282 = vld [vmem:[%s10 + $0x7] sm:$0x1]
    %v284 = vperm.slane %v282, 0
    %v286 = vmul.f32 %v281, %v284
    %vm287 = vcmask 261120
    %v288 = vsel %vm287, %v286, 0.0
    %289 = vadd.xlane.f32.xlu0 %v288
    %v290 = vpop.xlane.xlu0 %289
    %v291 = vld [vmem:[%s10 + $0x6] sm:$0x1]
    %v293 = vperm.slane %v291, 0
    %v295 = vadd.f32 %v290, %v293
    %v296 = vxor.u32 %v295, 2147483648
    %v297 = vmul.f32 %v296, 1.442695
    %v298 = vpow.pop %v297
    %v299 = vadd.f32 %v298, 1.0
    %v300 = vrcp.pop %v299
    %v301 = vmul.f32 %v299, %v300
    %v302 = vsub.f32 1.0, %v301
    %v303 = vmul.f32 %v300, %v302
    %v304 = vadd.f32 %v300, %v303
    %vm305 = vweird.f32 %v299
    %vm306 = vweird.f32 %v300
    %vm307 = vmor %vm305, %vm306
    %v308 = vsel %vm307, %v300, %v304
    %v309 = vand.u32 2147483647, %v299
    %vm310 = vcmp.eq.f32.partialorder %v309, 8.507059e+37
    %v311 = vand.u32 %v299, 2147483648
    %v312 = vor.u32 1.1754944e-38, %v311
    %v313 = vsel %vm310, %v312, %v308
    %v314 = vmul.f32 1.0, %v313
    %v315 = vld [vmem:[%s7] sm:$0xf]
    %v316 = vld [vmem:[%s10 + $0x8] sm:$0x1]
    %v318 = vperm.slane %v316, 0
    %v321 = vsel %vm170, %v315, 0
    %323 = vmatpush.msra.mxu0 0.0
    %324 = vmatpush.msra.mxu0 0.0
    %325 = vmatpush.msra.mxu0 0.0
    %326 = vmatpush.msra.mxu0 0.0
    %327 = vmatpush.msra.mxu0 0.0
    %328 = vmatpush.msra.mxu0 0.0
    %329 = vmatpush.msra.mxu0 0.0
    %330 = vmatpush.msra.mxu0 0.0
    %331 = vmatpush.msra.mxu0 0.0
    %332 = vmatpush.msra.mxu0 0.0
    %333 = vmatpush.msra.mxu0 0.0
    %334 = vmatpush.msra.mxu0 0.0
    %335 = vmatpush.msra.mxu0 0.0
    %336 = vmatpush.msra.mxu0 0.0
    %337 = vmatpush.msra.mxu0 0.0
    %338 = vmatpush.msra.mxu0 %v321
    %339 = vmatmul.f32.gmra.mxu0 %v256
    %v340 = vpop.f32.mrf.mxu0
    %v341 = vadd.f32 %v318, %v340
    %342 = vdwg.mxu0
    %v343 = vmax.f32 %v341, 0.0
    %v344 = vld [vmem:[%s8] sm:$0xff]
    %v345 = vld [vmem:[%s8 + $0x8] sm:$0xff]
    %v346 = vld [vmem:[%s8 + $0x10] sm:$0xff]
    %v347 = vld [vmem:[%s8 + $0x18] sm:$0xff]
    %v348 = vld [vmem:[%s8 + $0x20] sm:$0xff]
    %v349 = vld [vmem:[%s8 + $0x28] sm:$0xff]
    %v350 = vld [vmem:[%s8 + $0x30] sm:$0xff]
    %v351 = vld [vmem:[%s8 + $0x38] sm:$0xff]
    %v352 = vld [vmem:[%s10 + $0x9] sm:$0x1]
    %v354 = vperm.slane %v352, 0
    %v357 = vsel %vm124, %v343, 0
    %359 = vmatpush.msra.mxu0 0.0
    %360 = vmatpush.msra.mxu0 0.0
    %361 = vmatpush.msra.mxu0 0.0
    %362 = vmatpush.msra.mxu0 0.0
    %363 = vmatpush.msra.mxu0 0.0
    %364 = vmatpush.msra.mxu0 0.0
    %365 = vmatpush.msra.mxu0 0.0
    %366 = vmatpush.msra.mxu0 0.0
    %367 = vmatpush.msra.mxu0 %v351
    %368 = vmatpush.msra.mxu0 %v350
    %369 = vmatpush.msra.mxu0 %v349
    %370 = vmatpush.msra.mxu0 %v348
    %371 = vmatpush.msra.mxu0 %v347
    %372 = vmatpush.msra.mxu0 %v346
    %373 = vmatpush.msra.mxu0 %v345
    %374 = vmatpush.msra.mxu0 %v344
    %375 = vmatmul.f32.gmra.mxu0 %v357
    %v376 = vpop.f32.mrf.mxu0
    %v377 = vadd.f32 %v354, %v376
    %378 = vdwg.mxu0
    %v379 = vmax.f32 %v377, 0.0
    %v380 = vld [vmem:[%s9] sm:$0xff]
    %v381 = vld [vmem:[%s9 + $0x8] sm:$0xff]
    %v382 = vld [vmem:[%s9 + $0x10] sm:$0xff]
    %v383 = vld [vmem:[%s9 + $0x18] sm:$0xff]
    %v384 = vld [vmem:[%s9 + $0x20] sm:$0xff]
    %v385 = vld [vmem:[%s9 + $0x28] sm:$0xff]
    %v386 = vld [vmem:[%s9 + $0x30] sm:$0xff]
    %v387 = vld [vmem:[%s9 + $0x38] sm:$0xff]
    %v388 = vld [vmem:[%s9 + $0x40] sm:$0xff]
    %v389 = vld [vmem:[%s9 + $0x48] sm:$0xff]
    %v390 = vld [vmem:[%s9 + $0x50] sm:$0xff]
    %v391 = vld [vmem:[%s9 + $0x58] sm:$0xff]
    %v392 = vld [vmem:[%s9 + $0x60] sm:$0xff]
    %v393 = vld [vmem:[%s9 + $0x68] sm:$0xff]
    %v394 = vld [vmem:[%s9 + $0x70] sm:$0xff]
    %v395 = vld [vmem:[%s9 + $0x78] sm:$0xff]
    %v396 = vld [vmem:[%s10 + $0xa] sm:$0x1]
    %v398 = vperm.slane %v396, 0
    %400 = vmatpush.msra.mxu0 %v395
    %401 = vmatpush.msra.mxu0 %v394
    %402 = vmatpush.msra.mxu0 %v393
    %403 = vmatpush.msra.mxu0 %v392
    %404 = vmatpush.msra.mxu0 %v391
    %405 = vmatpush.msra.mxu0 %v390
    %406 = vmatpush.msra.mxu0 %v389
    %407 = vmatpush.msra.mxu0 %v388
    %408 = vmatpush.msra.mxu0 %v387
    %409 = vmatpush.msra.mxu0 %v386
    %410 = vmatpush.msra.mxu0 %v385
    %411 = vmatpush.msra.mxu0 %v384
    %412 = vmatpush.msra.mxu0 %v383
    %413 = vmatpush.msra.mxu0 %v382
    %414 = vmatpush.msra.mxu0 %v381
    %415 = vmatpush.msra.mxu0 %v380
    %416 = vmatmul.f32.gmra.mxu0 %v379
    %v417 = vpop.f32.mrf.mxu0
    %v418 = vadd.f32 %v398, %v417
    %419 = vdwg.mxu0
    %v420 = vxor.u32 %v418, 2147483648
    %v421 = vmul.f32 %v420, 1.442695
    %v422 = vpow.pop %v421
    %v423 = vadd.f32 %v422, 1.0
    %v424 = vrcp.pop %v423
    %v425 = vmul.f32 %v423, %v424
    %v426 = vsub.f32 1.0, %v425
    %v427 = vmul.f32 %v424, %v426
    %v428 = vadd.f32 %v424, %v427
    %vm429 = vweird.f32 %v423
    %vm430 = vweird.f32 %v424
    %vm431 = vmor %vm429, %vm430
    %v432 = vsel %vm431, %v424, %v428
    %v433 = vand.u32 2147483647, %v423
    %vm434 = vcmp.eq.f32.partialorder %v433, 8.507059e+37
    %v435 = vand.u32 %v423, 2147483648
    %v436 = vor.u32 1.1754944e-38, %v435
    %v437 = vsel %vm434, %v436, %v432
    %v438 = vmul.f32 1.0, %v437
    %v439 = vsel %vm46, %v438, 0.0
    %440 = vst [vmem:[#allocation2] sm:$0xff] %v439
    %442 = vrot.lane.b32.xlu0 %v314, 8
    %v443 = vpop.permute.xlu0 %442
    %vm445 = vcmask 64512
    %v446 = vsel %vm445, %v146, %v443
    %vm447 = vcmask 72704
    %v448 = vsel %vm447, %v446, 0.0
    %449 = vst [vmem:[#allocation2 + $0x8] sm:$0xff] %v448
    // Predicated region
    $region46: #{tpu_custom_call.1} parent=1 // pred_check
      _
    $region47: #{tpu_custom_call.1} parent=1 // pred_check_branch
      %451 = sbr.rel (0) target = $region49
    $region48: #{tpu_custom_call.1} parent=1 // pred_region
      %453 = vsyncadd [#allocation3], 0
      %s455 = sshll.u32 [#allocation2], 4
      %s456 = int_to_ptr.vmem [resolvable:$true] %s455
      %s457 = sshll.u32 %s11, 4
      %s458 = int_to_ptr.hbm [resolvable:$true] %s457
      %460 = dma.vmem_to_hbm [thread:$0]  %s456, 256, %s458, [#allocation3]
    $region49: #{tpu_custom_call.1} parent=1 // pred_fallthru
      _
    // Predicated region
    $region50: #{tpu_custom_call.1} parent=1 // pred_check
      _
    $region51: #{tpu_custom_call.1} parent=1 // pred_check_branch
      %462 = sbr.rel (0) target = $region53
    $region52: #{tpu_custom_call.1} parent=1 // pred_region
      %464 = dma.done [#allocation3], 256
    $region53: #{tpu_custom_call.1} parent=1 // pred_fallthru
      _
    %465 = vsyncpa [#allocation3], 1

</llo_original>
